<compile_context>
chip_gen: v6e
topology: v6e:2x2x1
jax: 0.10.0
libtpu: 0.0.40
codegen_flags: <defaults>
</compile_context>

<pallas_src>
import math

import jax
import jax.numpy as jnp
from jax.experimental import pallas as pl
from jax.experimental.pallas import tpu as pltpu


def _fused_linear_kernel(x_ref, w_ref, b_ref, out_ref):
    # Single MXU matmul with f32 accumulation; bias [1, N] broadcasts over rows.
    acc = jnp.dot(x_ref[...], w_ref[...], preferred_element_type=jnp.float32)
    out_ref[...] = (acc + b_ref[...]).astype(out_ref.dtype)


def _run_fused_linear(x2, w, b, out_dtype, rows_per_tile):
    """x2: [R, K] @ w: [K, N] + b: [1, N] -> [R, N]."""
    R, K = x2.shape
    N = w.shape[1]

    flops = 2 * R * K * N
    bytes_accessed = (
        x2.size * x2.dtype.itemsize
        + w.size * w.dtype.itemsize
        + b.size * b.dtype.itemsize
        + R * N * jnp.dtype(out_dtype).itemsize
    )
    cost = pl.CostEstimate(flops=flops, transcendentals=0,
                           bytes_accessed=bytes_accessed)

    if R <= rows_per_tile:
        # Single tile: grid-free, full arrays resident in VMEM (no pipeline
        # prologue/epilogue overhead for small batches).
        # TODO(synk): on v7x this single-tile path uses one TensorCore; for
        # medium batches a 2-program grid would stream x on both TCs.
        return pl.pallas_call(
            _fused_linear_kernel,
            out_shape=jax.ShapeDtypeStruct((R, N), out_dtype),
            in_specs=[pl.BlockSpec(memory_space=pltpu.MemorySpace.VMEM)] * 3,
            out_specs=pl.BlockSpec(memory_space=pltpu.MemorySpace.VMEM),
            cost_estimate=cost,
        )(x2, w, b)

    # Tiled batch axis.  Weights/bias index_maps return (0, 0) every step so
    # they are DMA'd once and stay VMEM-resident; batch axis is "parallel"
    # (megacore sharding on v7x).  No wrapper pad: partial last block is
    # masked on writeback by Pallas.
    tile = max(8, (rows_per_tile // 8) * 8)
    nb = pl.cdiv(R, tile)
    return pl.pallas_call(
        _fused_linear_kernel,
        out_shape=jax.ShapeDtypeStruct((R, N), out_dtype),
        grid=(nb,),
        in_specs=[
            pl.BlockSpec((tile, K), lambda i: (i, 0)),
            pl.BlockSpec((K, N), lambda i: (0, 0)),   # VMEM-resident weight
            pl.BlockSpec((1, N), lambda i: (0, 0)),   # VMEM-resident bias
        ],
        out_specs=pl.BlockSpec((tile, N), lambda i: (i, 0)),
        compiler_params=pltpu.CompilerParams(
            dimension_semantics=("parallel",),
        ),
        cost_estimate=cost,
    )(x2, w, b)


def make_sender_forward(w1, b1, w2, b2, *, rows_per_tile=16384):
    """Builds the Sender forward with weights folded + lane-densified ONCE.

    w1: [H, E], b1: [H], w2: [C, H], b2: [C]  (PyTorch Linear layout).
    Returned callable maps x: [B, E] -> logits [B, C].
    """
    E = w1.shape[1]
    C = w2.shape[0]
    dtype = w1.dtype

    # Exact offline fold of Linear∘Linear (no activation in the module).
    w_fused = (w1.T @ w2.T).astype(dtype)                      # [E, C]
    b_row = (b1 @ w2.T + b2).astype(jnp.float32).reshape(1, C)  # [1, C]

    # Lane-dense block-diagonal reformulation: pack `p` batch rows per packed
    # row so the output lane width becomes p*C (a multiple of 128).
    pack = 128 // math.gcd(C, 128)
    if pack > 16:        # keep the block-diag weight small; fall back otherwise
        pack = 1
    if pack > 1:
        w_bd = jnp.kron(jnp.eye(pack, dtype=dtype), w_fused)   # [p*E, p*C]
        b_bd = jnp.tile(b_row, (1, pack))                      # [1, p*C]
    else:
        w_bd, b_bd = w_fused, b_row

    packed_tile = max(8, (rows_per_tile // max(pack, 1) // 8) * 8)
    plain_tile = max(8, (rows_per_tile // 8) * 8)

    @jax.jit
    def forward(x):
        B = x.shape[0]
        if pack > 1 and B % pack == 0:
            x2 = x.reshape(B // pack, pack * E)                 # free reshape
            out2 = _run_fused_linear(x2, w_bd, b_bd, x.dtype, packed_tile)
            return out2.reshape(B, C)                           # free reshape
        # Fallback (B not a multiple of `pack`): plain lane-sparse GEMM.
        return _run_fused_linear(x, w_fused, b_row, x.dtype, plain_tile)

    return forward


if __name__ == "__main__":
    embed_dim, hidden_dim, num_classes = 32, 64, 16

    key = jax.random.PRNGKey(0)
    kw1, kb1, kw2, kb2, kx1, kx2, kx3 = jax.random.split(key, 7)

    # PyTorch nn.Linear weight layout: [out_features, in_features].
    w1 = jax.random.normal(kw1, (hidden_dim, embed_dim), jnp.float32) * 0.1
    b1 = jax.random.normal(kb1, (hidden_dim,), jnp.float32) * 0.1
    w2 = jax.random.normal(kw2, (num_classes, hidden_dim), jnp.float32) * 0.1
    b2 = jax.random.normal(kb2, (num_classes,), jnp.float32) * 0.1

    def reference(x):
        # Pure-JAX reference with the module's exact two-Linear semantics.
        h = x @ w1.T + b1
        return h @ w2.T + b2

    forward = make_sender_forward(w1, b1, w2, b2)

    # Path 1: tiny batch (multiple of 8) -> lane-dense single-tile kernel.
    x_small = jax.random.normal(kx1, (8, embed_dim), jnp.float32)
    out_small = jax.block_until_ready(forward(x_small))
    assert out_small.shape == (8, num_classes)
    assert jnp.allclose(out_small, reference(x_small), atol=1e-4, rtol=1e-4), \
        "mismatch vs reference (lane-dense single-tile path)"

    # Path 2: batch not a multiple of 8 -> plain fallback path.
    x_odd = jax.random.normal(kx2, (20, embed_dim), jnp.float32)
    out_odd = jax.block_until_ready(forward(x_odd))
    assert out_odd.shape == (20, num_classes)
    assert jnp.allclose(out_odd, reference(x_odd), atol=1e-4, rtol=1e-4), \
        "mismatch vs reference (plain fallback path)"

    # Path 3: tiled grid path with a ragged last block (tiny tile override just
    # to exercise tiling, partial-block masking, weight residency, and the
    # parallel batch axis at test scale; production default is 16384 rows).
    forward_tiled = make_sender_forward(w1, b1, w2, b2, rows_per_tile=64)
    x_big = jax.random.normal(kx3, (200, embed_dim), jnp.float32)
    out_big = jax.block_until_ready(forward_tiled(x_big))
    assert out_big.shape == (200, num_classes)
    assert jnp.allclose(out_big, reference(x_big), atol=1e-4, rtol=1e-4), \
        "mismatch vs reference (tiled grid path with ragged tail)"

    print("KERNEL_OK")
</pallas_src>

<mosaic_0001>
module attributes {stable_mosaic.version = 11 : i64} {
  func.func @_fused_linear_kernel(%arg0: memref<1x256xf32, #tpu.memory_space<vmem>>, %arg1: memref<256x128xf32, #tpu.memory_space<vmem>>, %arg2: memref<1x128xf32, #tpu.memory_space<vmem>>, %arg3: memref<1x128xf32, #tpu.memory_space<vmem>>) attributes {dimension_semantics = [], scalar_prefetch = 0 : i64, scratch_operands = 0 : i64, tpu.core_type = #tpu.core_type<tc>} {
    %c0 = arith.constant 0 : index
    %c0_0 = arith.constant 0 : index
    %0 = vector.load %arg0[%c0, %c0_0] : memref<1x256xf32, #tpu.memory_space<vmem>>, vector<1x256xf32>
    %c0_1 = arith.constant 0 : index
    %c0_2 = arith.constant 0 : index
    %1 = vector.load %arg1[%c0_1, %c0_2] : memref<256x128xf32, #tpu.memory_space<vmem>>, vector<256x128xf32>
    %cst = arith.constant dense<0.000000e+00> : vector<1x128xf32>
    %2 = tpu.matmul %0, %1, %cst {dimension_numbers = #tpu.dot_dimension_numbers<[1], [0], [0], [1], [0, 0, 1, 1], [], []>} : vector<1x256xf32>, vector<256x128xf32>, vector<1x128xf32> -> vector<1x128xf32>
    %c0_3 = arith.constant 0 : index
    %c0_4 = arith.constant 0 : index
    %3 = vector.load %arg2[%c0_3, %c0_4] : memref<1x128xf32, #tpu.memory_space<vmem>>, vector<1x128xf32>
    %4 = arith.addf %2, %3 : vector<1x128xf32>
    %c0_5 = arith.constant 0 : index
    %c0_6 = arith.constant 0 : index
    %5 = vector.load %arg3[%c0_5, %c0_6] : memref<1x128xf32, #tpu.memory_space<vmem>>, vector<1x128xf32>
    tpu.vector_store %arg3[%c0_5, %c0_6], %4 {strides = array<i32>} : memref<1x128xf32, #tpu.memory_space<vmem>>, vector<1x128xf32>,
    return
  }
}

</mosaic_0001>

<llo_original>
// kernel: forward.1
$region0: #{forward.1}
  #allocation0 [shape = 'u32[]', space=smem, size = 0x4, offset = 0x4, fixed_abs, tag = 'smem constant byte address 0x4 - core index']
  #allocation1 [shape = 'u32[144,128]{1,0:T(1,128)}', space=vmem, size = 0x12000, scoped, tag = 'internal scratch']
  %s0 = inlined_call_operand.vmem [shape: f32[1,256], index: 0, kind: input, shape index: {}]
  %s1 = inlined_call_operand.hbm [shape: f32[256,128], index: 1, kind: input, shape index: {}]
  %s2 = inlined_call_operand.vmem [shape: f32[1,128], index: 2, kind: input, shape index: {}]
  %s3 = inlined_call_operand.vmem [shape: f32[1,128], index: 3, kind: output, shape index: {}]
  %s4 = sld [smem:[#allocation0]]
  $region26: #{forward.1} parent=0
    _
  %s6 = ssub.s32 1, %s4
  %s7 = scalar_select 0, %s6, %s4
  $region1: #{forward.1} parent=0
    #allocation2 [shape = 'u8[131072]{0}', space=vmem, size = 0x20000, scoped, tag = 'input window, operand 1, single buffered']
    #allocation3 [shape = 's32[1]{0}', space=sflag, size = 0x4, scoped, tag = 'scoped memory for forward.1']
    %8 = vsyncpa [#allocation3], 0
    // Predicated region
    $region2: #{forward.1} parent=1 // pred_check
      _
    $region3: #{forward.1} parent=1 // pred_check_branch
      %10 = sbr.rel (0) target = $region5
    $region4: #{forward.1} parent=1 // pred_region
      _
    $region5: #{forward.1} parent=1 // pred_fallthru
      _
    // Predicated region
    $region6: #{forward.1} parent=1 // pred_check
      _
    $region7: #{forward.1} parent=1 // pred_check_branch
      %12 = sbr.rel (0) target = $region9
    $region8: #{forward.1} parent=1 // pred_region
      %s14 = ssub.s32 4096, 4096
      %15 = vsyncadd [#allocation3], %s14
      %s16 = sshll.u32 [#allocation2], 4
      %s17 = int_to_ptr.vmem [resolvable:$true] %s16
      %22 = dma.hbm_to_vmem [thread:$0]  %s1, 4096, %s17, [#allocation3], 128, 128, 8
    $region9: #{forward.1} parent=1 // pred_fallthru
      _
    // Predicated region
    $region10: #{forward.1} parent=1 // pred_check
      _
    $region11: #{forward.1} parent=1 // pred_check_branch
      %24 = sbr.rel (0) target = $region13
    $region12: #{forward.1} parent=1 // pred_region
      _
    $region13: #{forward.1} parent=1 // pred_fallthru
      _
    // Predicated region
    $region14: #{forward.1} parent=1 // pred_check
      _
    $region15: #{forward.1} parent=1 // pred_check_branch
      %26 = sbr.rel (0) target = $region17
    $region16: #{forward.1} parent=1 // pred_region
      %27 = dma.done [#allocation3], 4096
    $region17: #{forward.1} parent=1 // pred_fallthru
      _
    %v28 = vld [vmem:[%s0] sm:$0x3]
    %v29 = vld [vmem:[#allocation2] sm:$0xff]
    %v30 = vld [vmem:[#allocation2 + $0x8] sm:$0xff]
    %v31 = vld [vmem:[#allocation2 + $0x10] sm:$0xff]
    %v32 = vld [vmem:[#allocation2 + $0x18] sm:$0xff]
    %v33 = vld [vmem:[#allocation2 + $0x20] sm:$0xff]
    %v34 = vld [vmem:[#allocation2 + $0x28] sm:$0xff]
    %v35 = vld [vmem:[#allocation2 + $0x30] sm:$0xff]
    %v36 = vld [vmem:[#allocation2 + $0x38] sm:$0xff]
    %v37 = vld [vmem:[#allocation2 + $0x40] sm:$0xff]
    %v38 = vld [vmem:[#allocation2 + $0x48] sm:$0xff]
    %v39 = vld [vmem:[#allocation2 + $0x50] sm:$0xff]
    %v40 = vld [vmem:[#allocation2 + $0x58] sm:$0xff]
    %v41 = vld [vmem:[#allocation2 + $0x60] sm:$0xff]
    %v42 = vld [vmem:[#allocation2 + $0x68] sm:$0xff]
    %v43 = vld [vmem:[#allocation2 + $0x70] sm:$0xff]
    %v44 = vld [vmem:[#allocation2 + $0x78] sm:$0xff]
    %v45 = vld [vmem:[#allocation2 + $0x80] sm:$0xff]
    %v46 = vld [vmem:[#allocation2 + $0x88] sm:$0xff]
    %v47 = vld [vmem:[#allocation2 + $0x90] sm:$0xff]
    %v48 = vld [vmem:[#allocation2 + $0x98] sm:$0xff]
    %v49 = vld [vmem:[#allocation2 + $0xa0] sm:$0xff]
    %v50 = vld [vmem:[#allocation2 + $0xa8] sm:$0xff]
    %v51 = vld [vmem:[#allocation2 + $0xb0] sm:$0xff]
    %v52 = vld [vmem:[#allocation2 + $0xb8] sm:$0xff]
    %v53 = vld [vmem:[#allocation2 + $0xc0] sm:$0xff]
    %v54 = vld [vmem:[#allocation2 + $0xc8] sm:$0xff]
    %v55 = vld [vmem:[#allocation2 + $0xd0] sm:$0xff]
    %v56 = vld [vmem:[#allocation2 + $0xd8] sm:$0xff]
    %v57 = vld [vmem:[#allocation2 + $0xe0] sm:$0xff]
    %v58 = vld [vmem:[#allocation2 + $0xe8] sm:$0xff]
    %v59 = vld [vmem:[#allocation2 + $0xf0] sm:$0xff]
    %v60 = vld [vmem:[#allocation2 + $0xf8] sm:$0xff]
    %v61 = vld [vmem:[%s2] sm:$0x1]
    %v63 = vlaneseq
    %v64 = vshrl.u32 %v63, 7
    %v65 = vsub.s32 0, %v64
    %v66 = vrot.slane %v28, %v65
    %v67 = vlaneseq
    %v68 = vshrl.u32 %v67, 7
    %v69 = vsub.s32 1, %v68
    %v70 = vrot.slane %v28, %v69
    %73 = vmatprep.subr.mxu0 0.0
    %74 = vmatpush1.msra.mxu0 %v44
    %75 = vmatprep.subr.mxu0 0.0
    %76 = vmatpush1.msra.mxu0 %v43
    %77 = vmatprep.subr.mxu0 0.0
    %78 = vmatpush1.msra.mxu0 %v42
    %79 = vmatprep.subr.mxu0 0.0
    %80 = vmatpush1.msra.mxu0 %v41
    %81 = vmatprep.subr.mxu0 0.0
    %82 = vmatpush1.msra.mxu0 %v40
    %83 = vmatprep.subr.mxu0 0.0
    %84 = vmatpush1.msra.mxu0 %v39
    %85 = vmatprep.subr.mxu0 0.0
    %86 = vmatpush1.msra.mxu0 %v38
    %87 = vmatprep.subr.mxu0 0.0
    %88 = vmatpush1.msra.mxu0 %v37
    %89 = vmatprep.subr.mxu0 0.0
    %90 = vmatpush1.msra.mxu0 %v36
    %91 = vmatprep.subr.mxu0 0.0
    %92 = vmatpush1.msra.mxu0 %v35
    %93 = vmatprep.subr.mxu0 0.0
    %94 = vmatpush1.msra.mxu0 %v34
    %95 = vmatprep.subr.mxu0 0.0
    %96 = vmatpush1.msra.mxu0 %v33
    %97 = vmatprep.subr.mxu0 0.0
    %98 = vmatpush1.msra.mxu0 %v32
    %99 = vmatprep.subr.mxu0 0.0
    %100 = vmatpush1.msra.mxu0 %v31
    %101 = vmatprep.subr.mxu0 0.0
    %102 = vmatpush1.msra.mxu0 %v30
    %103 = vmatprep.subr.mxu0 0.0
    %104 = vmatpush1.msra.mxu0 %v29
    %105 = vmatprep.subr.mxu0 0.0
    %106 = vmatpush2.msra.mxu0 %v60
    %107 = vmatprep.subr.mxu0 0.0
    %108 = vmatpush2.msra.mxu0 %v59
    %109 = vmatprep.subr.mxu0 0.0
    %110 = vmatpush2.msra.mxu0 %v58
    %111 = vmatprep.subr.mxu0 0.0
    %112 = vmatpush2.msra.mxu0 %v57
    %113 = vmatprep.subr.mxu0 0.0
    %114 = vmatpush2.msra.mxu0 %v56
    %115 = vmatprep.subr.mxu0 0.0
    %116 = vmatpush2.msra.mxu0 %v55
    %117 = vmatprep.subr.mxu0 0.0
    %118 = vmatpush2.msra.mxu0 %v54
    %119 = vmatprep.subr.mxu0 0.0
    %120 = vmatpush2.msra.mxu0 %v53
    %121 = vmatprep.subr.mxu0 0.0
    %122 = vmatpush2.msra.mxu0 %v52
    %123 = vmatprep.subr.mxu0 0.0
    %124 = vmatpush2.msra.mxu0 %v51
    %125 = vmatprep.subr.mxu0 0.0
    %126 = vmatpush2.msra.mxu0 %v50
    %127 = vmatprep.subr.mxu0 0.0
    %128 = vmatpush2.msra.mxu0 %v49
    %129 = vmatprep.subr.mxu0 0.0
    %130 = vmatpush2.msra.mxu0 %v48
    %131 = vmatprep.subr.mxu0 0.0
    %132 = vmatpush2.msra.mxu0 %v47
    %133 = vmatprep.subr.mxu0 0.0
    %134 = vmatpush2.msra.mxu0 %v46
    %135 = vmatprep.subr.mxu0 0.0
    %136 = vmatpush2.msra.mxu0 %v45
    %137 = vmatprep.mubr.f32.mxu0 %v70
    %138 = vmatmul.mubr.f32.gmra.mxu0 %v66
    %v139 = vpop.f32.mrf.mxu0
    %v140 = vadd.f32 %v61, %v139
    %v141 = vpop.f32.mrf.mxu0
    %142 = vdwg.mxu0
    %143 = vst [vmem:[%s3] sm:$0x1] %v140
    // Predicated region
    $region18: #{forward.1} parent=1 // pred_check
      _
    $region19: #{forward.1} parent=1 // pred_check_branch
      %145 = sbr.rel (0) target = $region21
    $region20: #{forward.1} parent=1 // pred_region
      _
    $region21: #{forward.1} parent=1 // pred_fallthru
      _
    // Predicated region
    $region22: #{forward.1} parent=1 // pred_check
      _
    $region23: #{forward.1} parent=1 // pred_check_branch
      %147 = sbr.rel (0) target = $region25
    $region24: #{forward.1} parent=1 // pred_region
      _
    $region25: #{forward.1} parent=1 // pred_fallthru
      _
    %148 = vsyncpa [#allocation3], 1

</llo_original>
